<compile_context>
chip_gen: v7x
topology: tpu7x:2x2x1
jax: 0.10.0
libtpu: 0.0.40
codegen_flags: <defaults>
</compile_context>

<pallas_src>
import functools
import math

import jax
import jax.numpy as jnp
from jax import lax
from jax.experimental import pallas as pl
from jax.experimental.pallas import tpu as pltpu


def _pick_tile(b):
    """Largest multiple-of-8 tile (<=128) dividing b, preferring >= 2 blocks."""
    for c in (128, 64, 32, 16, 8):
        if b % c == 0 and b // c >= 2:
            return c
    for c in (128, 64, 32, 16, 8):
        if b % c == 0:
            return c
    # TODO(synk): batch sizes with no multiple-of-8 divisor fall back to a
    # single un-tiled block along that axis (correct, but unpipelined).
    return b


def _vmem_limit_bytes():
    """Scoped VMEM budget: ~3/4 of physical, capped at 96 MiB.

    v5e/v6e have 128 MiB physical (default 32 MiB scoped is too tight for
    128-wide tiles at large D); v7x has only 64 MiB physical.
    """
    try:
        cap = getattr(pltpu.get_tpu_info(), "vmem_capacity_bytes", None)
        if cap:
            return int(min(96 * 1024 * 1024, (cap * 3) // 4))
    except Exception:
        pass
    return 32 * 1024 * 1024


def _normalize_kernel(x_ref, o_ref):
    """Row-wise L2 normalize (F.normalize p=2 dim=-1 semantics) for the
    stacked (2, tb, D) student/teacher block; emits `o_ref.dtype` (bf16 by
    default) so the Gram matmul runs at bf16 MXU throughput."""
    for a in range(2):                       # student / teacher slabs, 2-D ops only
        x = x_ref[a]                         # (tb, D) f32
        sumsq = jnp.sum(x * x, axis=-1, keepdims=True)
        # x / max(||x||, 1e-12) == x * rsqrt(max(||x||^2, 1e-24))
        inv = lax.rsqrt(jnp.maximum(sumsq, 1e-24))
        o_ref[a] = (x * inv).astype(o_ref.dtype)


def _cc_tile_kernel(ri_ref, ci_ref, w_ref, rows_ref, cols_ref, out_ref, *,
                    coeffs, tb, t_per_core):
    c = pl.program_id(0)   # core split ("parallel")
    t = pl.program_id(1)   # position in this core's triangle visit list

    @pl.when(t == 0)
    def _():
        out_ref[...] = jnp.zeros_like(out_ref)

    # A @ Bᵀ expressed as a direct feature-axis contraction: low-precision
    # operands, f32 MXU accumulation, no explicit operand transpose.
    dims = (((1,), (1,)), ((), ()))
    sim_s = lax.dot_general(rows_ref[0], cols_ref[0], dims,
                            preferred_element_type=jnp.float32)
    sim_t = lax.dot_general(rows_ref[1], cols_ref[1], dims,
                            preferred_element_type=jnp.float32)

    cs = coeffs  # static python floats (hoisted; no per-iter broadcasts)
    if len(cs) == 1:
        # P_order == 0: both correlation matrices are the same constant.
        diff = jnp.zeros_like(sim_s)
    else:
        # Horner evaluation on both sims: 1 mul + 1 add per order.
        corr_s = cs[-1] * sim_s + cs[-2]
        corr_t = cs[-1] * sim_t + cs[-2]
        for coef in reversed(cs[:-2]):
            corr_s = corr_s * sim_s + coef
            corr_t = corr_t * sim_t + coef
        diff = corr_s - corr_t

    sq = diff * diff

    if tb % 8 == 0:
        # Sublane-preserving partial sum: (tb, tb) -> (8, tb) via static-slice
        # vreg adds on the VPU (no cross-sublane XLU reduce, no broadcast).
        partial = sq[0:8, :]
        for g in range(1, tb // 8):
            partial = partial + sq[g * 8:(g + 1) * 8, :]
    else:
        # Un-tiled odd-B fallback: broadcast into the 8 sublanes; the extra
        # factor of 8 is divided out in the wrapper.
        partial = jnp.sum(sq, axis=0, keepdims=True)

    # Triangle weight: 1.0 diagonal tile, 2.0 off-diagonal, 0.0 padding.
    w = w_ref[c * t_per_core + t]
    out_ref[...] += partial * w


def cc_loss(feat_s, feat_t, *, gamma, p_order, gram_dtype=jnp.bfloat16):
    """Pallas implementation of CC(gamma, P_order).forward(feat_s, feat_t)."""
    assert feat_s.shape == feat_t.shape and feat_s.ndim == 2
    B, D = feat_s.shape
    coeffs = tuple(
        float(math.exp(-2.0 * gamma) * (2.0 * gamma) ** p / math.factorial(p))
        for p in range(p_order + 1)
    )

    vmem_limit = _vmem_limit_bytes()
    stack = jnp.stack(
        [feat_s.astype(jnp.float32), feat_t.astype(jnp.float32)], axis=0)

    tb = _pick_tile(B)

    # ---- Stage 1: L2-normalize rows of the stacked (2, B, D) array. ----
    xn = pl.pallas_call(
        _normalize_kernel,
        out_shape=jax.ShapeDtypeStruct((2, B, D), gram_dtype),
        grid_spec=pltpu.PrefetchScalarGridSpec(
            num_scalar_prefetch=0,
            grid=(B // tb,),
            in_specs=[pl.BlockSpec((2, tb, D), lambda r: (0, r, 0))],
            out_specs=pl.BlockSpec((2, tb, D), lambda r: (0, r, 0)),
        ),
        compiler_params=pltpu.CompilerParams(
            dimension_semantics=("parallel",),
            vmem_limit_bytes=vmem_limit,
        ),
    )(stack)

    # ---- Stage 2: upper-triangle tile list, split across 2 "cores". ----
    ni = B // tb
    pairs = [(i, j) for i in range(ni) for j in range(i, ni)]
    n_tiles = len(pairs)
    n_cores = 2 if n_tiles > 1 else 1
    t_per_core = -(-n_tiles // n_cores)            # ceil
    total = n_cores * t_per_core
    last_i, last_j = pairs[-1]

    ri_l, ci_l, wt_l = [], [], []
    for idx in range(total):
        if idx < n_tiles:
            i, j = pairs[idx]
            ri_l.append(i)
            ci_l.append(j)
            wt_l.append(1.0 if i == j else 2.0)
        else:
            # Pad with the last real tile (weight 0) so the dummy step does
            # not trigger an extra DMA of a different block.
            ri_l.append(last_i)
            ci_l.append(last_j)
            wt_l.append(0.0)

    ri = jnp.asarray(ri_l, dtype=jnp.int32)
    ci = jnp.asarray(ci_l, dtype=jnp.int32)
    wt = jnp.asarray(wt_l, dtype=jnp.float32)

    def _rows_map(c, t, ri_r, ci_r, w_r):
        return (0, ri_r[c * t_per_core + t], 0)

    def _cols_map(c, t, ri_r, ci_r, w_r):
        return (0, ci_r[c * t_per_core + t], 0)

    def _out_map(c, t, ri_r, ci_r, w_r):
        return (c, 0)

    kernel = functools.partial(
        _cc_tile_kernel, coeffs=coeffs, tb=tb, t_per_core=t_per_core)

    partials = pl.pallas_call(
        kernel,
        out_shape=jax.ShapeDtypeStruct((n_cores * 8, tb), jnp.float32),
        grid_spec=pltpu.PrefetchScalarGridSpec(
            num_scalar_prefetch=3,
            grid=(n_cores, t_per_core),
            in_specs=[
                pl.BlockSpec((2, tb, D), _rows_map),   # stacked s/t row block
                pl.BlockSpec((2, tb, D), _cols_map),   # stacked s/t col block
            ],
            out_specs=pl.BlockSpec((8, tb), _out_map),
        ),
        compiler_params=pltpu.CompilerParams(
            dimension_semantics=("parallel", "arbitrary"),
            vmem_limit_bytes=vmem_limit,
        ),
    )(ri, ci, wt, xn, xn)

    # mse_loss(reduction='mean') divides by B*B; the odd-B fallback stores 8
    # identical sublane copies, hence the extra /8 on that path only.
    denom = float(B) * float(B)
    if tb % 8 != 0:
        denom *= 8.0
    return jnp.sum(partials) * (1.0 / denom)


def _cc_loss_ref(feat_s, feat_t, *, gamma, p_order):
    """Pure-JAX reference mirroring the PyTorch semantics (f32)."""

    def corr(x):
        norm = jnp.sqrt(jnp.sum(x * x, axis=-1, keepdims=True))
        xn = x / jnp.maximum(norm, 1e-12)
        sim = xn @ xn.T
        c = jnp.zeros_like(sim)
        for p in range(p_order + 1):
            coef = math.exp(-2.0 * gamma) * (2.0 * gamma) ** p / math.factorial(p)
            c = c + coef * sim**p
        return c

    d = corr(feat_s) - corr(feat_t)
    return jnp.mean(d * d)


if __name__ == "__main__":
    gamma = 0.4
    p_order = 2
    key = jax.random.PRNGKey(0)

    # Test 1: small single-tile path (bf16 Gram, loose-ish tolerance vs f32 ref).
    B, D = 8, 128
    ks, kt = jax.random.split(key)
    feat_s = jax.random.normal(ks, (B, D), dtype=jnp.float32)
    feat_t = jax.random.normal(kt, (B, D), dtype=jnp.float32)
    loss = jax.block_until_ready(
        cc_loss(feat_s, feat_t, gamma=gamma, p_order=p_order))
    ref = _cc_loss_ref(feat_s, feat_t, gamma=gamma, p_order=p_order)
    assert jnp.allclose(loss, ref, rtol=2e-2, atol=1e-4), (loss, ref)

    # Test 2: multi-tile shape exercising the symmetric upper-triangle
    # traversal, tile weights, 2-way core split and the pad tile (f32 Gram).
    B2, D2 = 32, 256
    ks2, kt2 = jax.random.split(kt)
    feat_s2 = jax.random.normal(ks2, (B2, D2), dtype=jnp.float32)
    feat_t2 = jax.random.normal(kt2, (B2, D2), dtype=jnp.float32)
    loss2 = jax.block_until_ready(
        cc_loss(feat_s2, feat_t2, gamma=gamma, p_order=p_order,
                gram_dtype=jnp.float32))
    ref2 = _cc_loss_ref(feat_s2, feat_t2, gamma=gamma, p_order=p_order)
    assert jnp.allclose(loss2, ref2, rtol=2e-2, atol=1e-6), (loss2, ref2)

    print("KERNEL_OK")
</pallas_src>

<mosaic_0001>
module attributes {stable_mosaic.version = 11 : i64} {
  func.func @_normalize_kernel(%arg0: i32, %arg1: memref<2x8x128xf32, #tpu.memory_space<vmem>>, %arg2: memref<2x8x128xbf16, #tpu.memory_space<vmem>>) attributes {dimension_semantics = [#tpu.dimension_semantics<parallel>], iteration_bounds = array<i64: 1>, scalar_prefetch = 0 : i64, scratch_operands = 0 : i64, tpu.core_type = #tpu.core_type<tc>, window_params = [{transform_indices = @transform_0, window_bounds = array<i64: 2, 8, 128>}, {transform_indices = @transform_1, window_bounds = array<i64: 2, 8, 128>}]} {
    %c0 = arith.constant 0 : index
    %c0_0 = arith.constant 0 : index
    %c0_1 = arith.constant 0 : index
    %0 = vector.load %arg1[%c0, %c0_0, %c0_1] : memref<2x8x128xf32, #tpu.memory_space<vmem>>, vector<1x8x128xf32>
    %1 = vector.shape_cast %0 : vector<1x8x128xf32> to vector<8x128xf32>
    %2 = arith.mulf %1, %1 : vector<8x128xf32>
    %cst = arith.constant dense<0.000000e+00> : vector<8xf32>
    %3 = vector.multi_reduction <add>, %2, %cst [1] : vector<8x128xf32> to vector<8xf32>
    %4 = vector.shape_cast %3 : vector<8xf32> to vector<8x1xf32>
    %cst_2 = arith.constant 1.000000e-24 : f32
    %5 = vector.broadcast %cst_2 : f32 to vector<8x1xf32>
    %6 = arith.maximumf %4, %5 : vector<8x1xf32>
    %7 = math.rsqrt %6 : vector<8x1xf32>
    %8 = vector.broadcast %7 : vector<8x1xf32> to vector<8x128xf32>
    %9 = arith.mulf %1, %8 : vector<8x128xf32>
    %10 = arith.truncf %9 : vector<8x128xf32> to vector<8x128xbf16>
    %c0_3 = arith.constant 0 : index
    %c0_4 = arith.constant 0 : index
    %c0_5 = arith.constant 0 : index
    %11 = vector.load %arg2[%c0_3, %c0_4, %c0_5] : memref<2x8x128xbf16, #tpu.memory_space<vmem>>, vector<1x8x128xbf16>
    %12 = vector.shape_cast %11 : vector<1x8x128xbf16> to vector<8x128xbf16>
    %13 = vector.shape_cast %10 : vector<8x128xbf16> to vector<1x8x128xbf16>
    tpu.vector_store %arg2[%c0_3, %c0_4, %c0_5], %13 {strides = array<i32>} : memref<2x8x128xbf16, #tpu.memory_space<vmem>>, vector<1x8x128xbf16>,
    %c1 = arith.constant 1 : index
    %c0_6 = arith.constant 0 : index
    %c0_7 = arith.constant 0 : index
    %14 = vector.load %arg1[%c1, %c0_6, %c0_7] : memref<2x8x128xf32, #tpu.memory_space<vmem>>, vector<1x8x128xf32>
    %15 = vector.shape_cast %14 : vector<1x8x128xf32> to vector<8x128xf32>
    %16 = arith.mulf %15, %15 : vector<8x128xf32>
    %cst_8 = arith.constant dense<0.000000e+00> : vector<8xf32>
    %17 = vector.multi_reduction <add>, %16, %cst_8 [1] : vector<8x128xf32> to vector<8xf32>
    %18 = vector.shape_cast %17 : vector<8xf32> to vector<8x1xf32>
    %cst_9 = arith.constant 1.000000e-24 : f32
    %19 = vector.broadcast %cst_9 : f32 to vector<8x1xf32>
    %20 = arith.maximumf %18, %19 : vector<8x1xf32>
    %21 = math.rsqrt %20 : vector<8x1xf32>
    %22 = vector.broadcast %21 : vector<8x1xf32> to vector<8x128xf32>
    %23 = arith.mulf %15, %22 : vector<8x128xf32>
    %24 = arith.truncf %23 : vector<8x128xf32> to vector<8x128xbf16>
    %c1_10 = arith.constant 1 : index
    %c0_11 = arith.constant 0 : index
    %c0_12 = arith.constant 0 : index
    %25 = vector.load %arg2[%c1_10, %c0_11, %c0_12] : memref<2x8x128xbf16, #tpu.memory_space<vmem>>, vector<1x8x128xbf16>
    %26 = vector.shape_cast %25 : vector<1x8x128xbf16> to vector<8x128xbf16>
    %27 = vector.shape_cast %24 : vector<8x128xbf16> to vector<1x8x128xbf16>
    tpu.vector_store %arg2[%c1_10, %c0_11, %c0_12], %27 {strides = array<i32>} : memref<2x8x128xbf16, #tpu.memory_space<vmem>>, vector<1x8x128xbf16>,
    return
  }
  func.func @transform_0(%arg0: i32) -> (i32, i32, i32) {
    %c0_i32 = arith.constant 0 : i32
    %c0_i32_0 = arith.constant 0 : i32
    %c0_i32_1 = arith.constant 0 : i32
    return %c0_i32, %arg0, %c0_i32_0 : i32, i32, i32
  }
  func.func @transform_1(%arg0: i32) -> (i32, i32, i32) {
    %c0_i32 = arith.constant 0 : i32
    %c0_i32_0 = arith.constant 0 : i32
    %c0_i32_1 = arith.constant 0 : i32
    return %c0_i32, %arg0, %c0_i32_0 : i32, i32, i32
  }
}

</mosaic_0001>

<llo_original>
// kernel: tpu_custom_call.1
$region0: #{tpu_custom_call.1}
  #allocation0 [shape = 'u32[]', space=smem, size = 0x4, offset = 0x4, fixed_abs, tag = 'smem constant byte address 0x4 - core index']
  #allocation1 [shape = 'u32[144,128]{1,0:T(1,128)}', space=vmem, size = 0x12000, scoped, tag = 'internal scratch']
  %s0 = inlined_call_operand.hbm [shape: f32[2,8,128], index: 0, kind: input, shape index: {}]
  %s1 = inlined_call_operand.hbm [shape: bf16[2,8,128], index: 1, kind: output, shape index: {}]
  %s2 = sld [smem:[#allocation0]]
  $region18: #{tpu_custom_call.1} parent=0
    _
  %s4 = ssub.s32 1, %s2
  %s5 = scalar_select 0, %s4, %s2
  $region1: #{tpu_custom_call.1} parent=0
    #allocation2 [shape = 'u8[8192]{0}', space=vmem, size = 0x2000, scoped, tag = 'input window, operand 0, single buffered']
    #allocation3 [shape = 's32[1]{0}', space=sflag, size = 0x4, scoped, tag = 'scoped memory for tpu_custom_call.1']
    #allocation4 [shape = 's32[1]{0}', space=sflag, size = 0x4, scoped, tag = 'scoped memory for tpu_custom_call.1']
    #allocation5 [shape = 'u8[4096]{0}', space=vmem, size = 0x1000, scoped, tag = 'output window, operand 0, single buffered']
    %6 = vsyncpa [#allocation3], 0
    %7 = vsyncpa [#allocation4], 0
    // Predicated region
    $region2: #{tpu_custom_call.1} parent=1 // pred_check
      _
    $region3: #{tpu_custom_call.1} parent=1 // pred_check_branch
      %9 = sbr.rel (0) target = $region5
    $region4: #{tpu_custom_call.1} parent=1 // pred_region
      %s11 = ssub.s32 256, 256
      %12 = vsyncadd [#allocation3], %s11
      %s13 = sshll.u32 [#allocation2], 4
      %s14 = int_to_ptr.vmem [resolvable:$true] %s13
      %19 = dma.hbm_to_vmem [thread:$0]  %s0, 256, %s14, [#allocation3], 128, 128, 8
    $region5: #{tpu_custom_call.1} parent=1 // pred_fallthru
      _
    // Predicated region
    $region6: #{tpu_custom_call.1} parent=1 // pred_check
      _
    $region7: #{tpu_custom_call.1} parent=1 // pred_check_branch
      %21 = sbr.rel (0) target = $region9
    $region8: #{tpu_custom_call.1} parent=1 // pred_region
      %22 = dma.done [#allocation3], 256
    $region9: #{tpu_custom_call.1} parent=1 // pred_fallthru
      _
    %v23 = vld [vmem:[#allocation2] sm:$0xff]
    %v24 = vmul.f32 %v23, %v23
    %25 = vadd.xlane.f32.xlu0 %v24
    %v26 = vpop.xlane.xlu0 %25
    %v27 = vmax.f32 %v26, 1e-24
    %v28 = vrsqrt.pop %v27
    %v29 = vmul.f32 %v23, %v28
    %v30 = vpack.c.bf16 %v29, %v29
    %31 = vst [vmem:[#allocation5] sm:$0xf] %v30
    %s32 = scalar_lea.vmem [#allocation2], 8
    %v33 = vld [vmem:[%s32] sm:$0xff]
    %v34 = vmul.f32 %v33, %v33
    %35 = vadd.xlane.f32.xlu0 %v34
    %v36 = vpop.xlane.xlu0 %35
    %v37 = vmax.f32 %v36, 1e-24
    %v38 = vrsqrt.pop %v37
    %v39 = vmul.f32 %v33, %v38
    %v40 = vpack.c.bf16 %v39, %v39
    %s41 = scalar_lea.vmem [#allocation5], 4
    %42 = vst [vmem:[%s41] sm:$0xf] %v40
    // Predicated region
    $region10: #{tpu_custom_call.1} parent=1 // pred_check
      _
    $region11: #{tpu_custom_call.1} parent=1 // pred_check_branch
      %44 = sbr.rel (0) target = $region13
    $region12: #{tpu_custom_call.1} parent=1 // pred_region
      %s46 = ssub.s32 128, 128
      %47 = vsyncadd [#allocation4], %s46
      %s48 = sshll.u32 [#allocation5], 4
      %s49 = int_to_ptr.vmem [resolvable:$true] %s48
      %54 = dma.vmem_to_hbm [thread:$0]  %s49, 128, %s1, [#allocation4], 64, 64, 4
    $region13: #{tpu_custom_call.1} parent=1 // pred_fallthru
      _
    // Predicated region
    $region14: #{tpu_custom_call.1} parent=1 // pred_check
      _
    $region15: #{tpu_custom_call.1} parent=1 // pred_check_branch
      %56 = sbr.rel (0) target = $region17
    $region16: #{tpu_custom_call.1} parent=1 // pred_region
      %57 = dma.done [#allocation4], 128
    $region17: #{tpu_custom_call.1} parent=1 // pred_fallthru
      _
    %58 = vsyncpa [#allocation3], 1
    %59 = vsyncpa [#allocation4], 1

</llo_original>
